<compile_context>
chip_gen: v5e
topology: v5e:2x2
jax: 0.10.0
libtpu: 0.0.40
codegen_flags: <defaults>
</compile_context>

<pallas_src>
import functools
import math

import jax
import jax.numpy as jnp
from jax.experimental import pallas as pl
from jax.experimental.pallas import tpu as pltpu

LANE = 128          # vreg lane width: last dims padded to multiples of this
SUBLANE_BF16 = 16   # bf16 packs 16 rows per sublane tile
_VMEM_MARGIN = 4 << 20   # headroom for Mosaic internal scratch


def _round_up(x: int, m: int) -> int:
    return ((x + m - 1) // m) * m


def _vmem_capacity_bytes() -> int:
    """Physical VMEM per TensorCore, generation aware; conservative fallback."""
    try:
        info = pltpu.get_tpu_info()
        cap = getattr(info, "vmem_capacity_bytes", None)
        if cap:
            return int(cap)
    except Exception:
        pass
    return 64 << 20   # v7x per-TC VMEM = smallest across v5e/v6e/v7x


def _plan_batch_tile(B, d0p, out_p, layer_widths, param_bytes):
    """Pick (tm, Bp, vmem_limit).

    tm: rows per grid step, multiple of 16 (bf16 sublane tile), as large as the
    per-TC VMEM budget allows (capped at 1024), but chosen so padded batches of
    >= 512 rows produce at least 2 grid steps (megacore sharding on v7x).
    """
    capacity = _vmem_capacity_bytes()
    budget = int(0.85 * capacity)                       # leave headroom
    # Per-row VMEM cost: double-buffered bf16 x tile + double-buffered bf16 out
    # tile + per-layer temps (f32 matmul result + bf16 activation copy).
    per_row = 2 * d0p * 2 + 2 * out_p * 2 + sum(6 * w for w in layer_widths)
    avail = budget - param_bytes - _VMEM_MARGIN
    tm_cap = (max(avail, 0) // max(per_row, 1)) // SUBLANE_BF16 * SUBLANE_BF16
    tm_cap = max(min(tm_cap, 1024), SUBLANE_BF16)

    B16 = _round_up(max(B, SUBLANE_BF16), SUBLANE_BF16)
    if B16 >= 512:
        # At least 2 grid steps so v7x's two TensorCores both get batch tiles.
        tm = min(tm_cap, _round_up(B16 // 2, SUBLANE_BF16))
    else:
        tm = min(tm_cap, B16)
    tm = max(tm, SUBLANE_BF16)
    Bp = _round_up(B16, tm)

    # Requested VMEM: single-buffered params + double-buffered I/O tiles + temps.
    need = (param_bytes
            + 2 * tm * d0p * 2            # x tile, bf16, double-buffered
            + 2 * tm * out_p * 2          # out tile, bf16, double-buffered
            + tm * sum(6 * w for w in layer_widths)
            + _VMEM_MARGIN)
    vmem_limit = int(min(max(need, 16 << 20), budget))
    return tm, Bp, vmem_limit


def _const_block_spec(shape):
    """Grid-invariant operand (weights/bias): request a single VMEM buffer."""
    try:
        return pl.BlockSpec(shape, lambda i: (0, 0), pipeline_mode=pl.Buffered(1))
    except TypeError:   # older jax without pipeline_mode kwarg
        return pl.BlockSpec(shape, lambda i: (0, 0))


def _fused_mlp_kernel(*refs, n_layers: int):
    """One grid step = one batch tile pushed through the whole padded MLP.

    refs = (x_ref, w0, b0, w1, b1, ..., w_{L-1}, b_{L-1}, o_ref)
      x_ref : (tm, d0p)          bf16 VMEM   (flattened, padded input tile)
      w_i   : (d_ip, d_{i+1}p)   bf16 VMEM   (torch weight transposed, zero-padded)
      b_i   : (1, d_{i+1}p)      f32  VMEM   (zero-padded)
      o_ref : (tm, d_Lp)         bf16 VMEM
    ReLU after every layer except the last.  MXU: bf16 x bf16 -> f32 acc;
    bias add stays f32; inter-layer activations are stored bf16.
    """
    x_ref = refs[0]
    o_ref = refs[-1]
    h = x_ref[...]                                        # bf16 tile
    for i in range(n_layers):
        w_ref = refs[1 + 2 * i]
        b_ref = refs[2 + 2 * i]
        y = jnp.dot(h, w_ref[...], preferred_element_type=jnp.float32)
        y = y + b_ref[...]                                # f32 bias epilogue
        if i < n_layers - 1:
            h = jnp.maximum(y, 0.0).astype(w_ref.dtype)   # fused ReLU -> bf16
        else:
            h = y
    o_ref[...] = h.astype(o_ref.dtype)                    # bf16 writeback


def fused_mlp(x_pad, params, tm, vmem_limit):
    """x_pad: (Bp, d0p) bf16, padded.  params: list of (w_pad bf16, b_pad f32)."""
    Bp, d0p = x_pad.shape
    n_layers = len(params)
    out_p = params[-1][0].shape[1]
    assert Bp % tm == 0
    grid = (Bp // tm,)

    in_specs = [pl.BlockSpec((tm, d0p), lambda i: (i, 0))]
    flat_params = []
    for w, b in params:
        in_specs.append(_const_block_spec(w.shape))
        in_specs.append(_const_block_spec(b.shape))
        flat_params += [w, b]
    out_specs = pl.BlockSpec((tm, out_p), lambda i: (i, 0))

    # Advisory cost estimate for XLA scheduling around the call.
    flops = int(2 * Bp * sum(w.shape[0] * w.shape[1] for w, _ in params))
    param_bytes = int(sum(w.size * w.dtype.itemsize + b.size * b.dtype.itemsize
                          for w, b in params))
    bytes_accessed = int(x_pad.size * x_pad.dtype.itemsize
                         + param_bytes + Bp * out_p * 2)   # bf16 writeback

    kernel = functools.partial(_fused_mlp_kernel, n_layers=n_layers)
    return pl.pallas_call(
        kernel,
        out_shape=jax.ShapeDtypeStruct((Bp, out_p), jnp.bfloat16),
        grid=grid,
        in_specs=in_specs,
        out_specs=out_specs,
        compiler_params=pltpu.CompilerParams(
            dimension_semantics=("parallel",),   # batch tiles split across TCs (v7x)
            vmem_limit_bytes=vmem_limit),
        cost_estimate=pl.CostEstimate(flops=flops, transcendentals=0,
                                      bytes_accessed=bytes_accessed),
    )(x_pad, *flat_params)


class ImageNNPallas:
    """JAX/Pallas port of the PyTorch ImageNN module (single fused kernel)."""

    def __init__(self, in_features: int, out_features: int, n_units_per_layer,
                 key=jax.random.PRNGKey(0), param_dtype=jnp.bfloat16):
        self.in_features = in_features
        self.out_features = out_features
        self.param_dtype = param_dtype

        dims = [in_features] + list(n_units_per_layer) + [out_features]
        self.dims = dims
        # Lane-dense padded widths.  NOTE: 128 exactly fills v5e's MXU; if
        # hidden widths ever become compute-bound on v6e/v7x, prefer real
        # widths that are multiples of 256 rather than more zero padding.
        self.pdims = [_round_up(d, LANE) for d in dims]

        keys = jax.random.split(key, len(dims) - 1)
        self.params = []   # list of (w_pad (p_in,p_out) bf16, b_pad (1,p_out) f32)
        for i in range(len(dims) - 1):
            d_in, d_out = dims[i], dims[i + 1]
            p_in, p_out = self.pdims[i], self.pdims[i + 1]
            kw, kb = jax.random.split(keys[i])
            bound = 1.0 / math.sqrt(d_in)   # torch.nn.Linear default init
            w_t = jax.random.uniform(kw, (d_in, d_out), jnp.float32, -bound, bound)
            b = jax.random.uniform(kb, (d_out,), jnp.float32, -bound, bound)
            # Zero-pad: padded rows/cols contribute exactly 0 through ReLU,
            # so real outputs are unchanged.
            w_pad = jnp.zeros((p_in, p_out), jnp.float32).at[:d_in, :d_out].set(w_t)
            b_pad = jnp.zeros((1, p_out), jnp.float32).at[0, :d_out].set(b)
            self.params.append((w_pad.astype(param_dtype), b_pad))

        self.layer_widths = [w.shape[1] for w, _ in self.params]
        self.param_bytes = int(sum(w.size * w.dtype.itemsize
                                   + b.size * b.dtype.itemsize
                                   for w, b in self.params))

    def __call__(self, x):
        B = x.shape[0]
        d0p = self.pdims[0]
        out_p = self.pdims[-1]
        tm, Bp, vmem_limit = _plan_batch_tile(
            B, d0p, out_p, self.layer_widths, self.param_bytes)

        # nn.Flatten(): keep batch dim, flatten the rest row-major (NCHW order).
        h = x.reshape(B, -1)
        assert h.shape[1] == self.in_features, h.shape
        h = h.astype(self.param_dtype)          # bf16 once, no f32 detour
        pad_rows = Bp - B
        pad_cols = d0p - self.in_features
        if pad_rows or pad_cols:                # skip the copy when already aligned
            h = jnp.pad(h, ((0, pad_rows), (0, pad_cols)))

        out_pad = fused_mlp(h, self.params, tm, vmem_limit)
        return out_pad[:B, :self.out_features].astype(jnp.float32)


if __name__ == "__main__":
    key = jax.random.PRNGKey(0)
    k_x, k_p = jax.random.split(key)

    # Small image-like input: batch=2, channels=4, spatial=16x16 (NCHW).
    B, C, H, W = 2, 4, 16, 16
    x = jax.random.normal(k_x, (B, C, H, W), jnp.float32)

    in_features = C * H * W          # 1024 after flatten
    n_units_per_layer = [32, 32]     # two hidden layers
    out_features = 10                # e.g. 10 classes

    model = ImageNNPallas(in_features, out_features, n_units_per_layer, key=k_p)
    out = model(x)
    out = jax.block_until_ready(out)

    # Pure-JAX reference mimicking the kernel numerics: bf16 operands,
    # f32 accumulation, f32 bias + ReLU epilogue, bf16 inter-layer activations
    # and bf16 final writeback (same padded params).
    hp = (jnp.zeros((B, model.pdims[0]), jnp.float32)
          .at[:, :in_features].set(x.reshape(B, -1)))
    hp = hp.astype(jnp.bfloat16)
    n_layers = len(model.params)
    ref_full = None
    for i, (w, b) in enumerate(model.params):
        y = jnp.dot(hp.astype(jnp.float32), w.astype(jnp.float32),
                    precision=jax.lax.Precision.HIGHEST) + b
        if i < n_layers - 1:
            hp = jnp.maximum(y, 0.0).astype(jnp.bfloat16)
        else:
            ref_full = y
    ref = ref_full.astype(jnp.bfloat16).astype(jnp.float32)[:, :out_features]

    assert out.shape == (B, out_features), out.shape
    assert jnp.allclose(out, ref, atol=1e-2, rtol=1e-2), (
        float(jnp.max(jnp.abs(out - ref))))
    print("KERNEL_OK")
</pallas_src>

<mosaic_0001>
module attributes {stable_mosaic.version = 11 : i64} {
  func.func @_fused_mlp_kernel(%arg0: i32, %arg1: memref<16x1024xbf16, #tpu.memory_space<vmem>>, %arg2: memref<1024x128xbf16, #tpu.memory_space<vmem>>, %arg3: memref<1x128xf32, #tpu.memory_space<vmem>>, %arg4: memref<128x128xbf16, #tpu.memory_space<vmem>>, %arg5: memref<1x128xf32, #tpu.memory_space<vmem>>, %arg6: memref<128x128xbf16, #tpu.memory_space<vmem>>, %arg7: memref<1x128xf32, #tpu.memory_space<vmem>>, %arg8: memref<16x128xbf16, #tpu.memory_space<vmem>>) attributes {dimension_semantics = [#tpu.dimension_semantics<parallel>], iteration_bounds = array<i64: 1>, scalar_prefetch = 0 : i64, scratch_operands = 0 : i64, tpu.core_type = #tpu.core_type<tc>, window_params = [{transform_indices = @transform_0, window_bounds = array<i64: 16, 1024>}, {pipeline_mode = #tpu.pipeline_mode<synchronous>, transform_indices = @transform_1, window_bounds = array<i64: 1024, 128>}, {pipeline_mode = #tpu.pipeline_mode<synchronous>, transform_indices = @transform_2, window_bounds = array<i64: 1, 128>}, {pipeline_mode = #tpu.pipeline_mode<synchronous>, transform_indices = @transform_3, window_bounds = array<i64: 128, 128>}, {pipeline_mode = #tpu.pipeline_mode<synchronous>, transform_indices = @transform_4, window_bounds = array<i64: 1, 128>}, {pipeline_mode = #tpu.pipeline_mode<synchronous>, transform_indices = @transform_5, window_bounds = array<i64: 128, 128>}, {pipeline_mode = #tpu.pipeline_mode<synchronous>, transform_indices = @transform_6, window_bounds = array<i64: 1, 128>}, {transform_indices = @transform_7, window_bounds = array<i64: 16, 128>}]} {
    %c0 = arith.constant 0 : index
    %c0_0 = arith.constant 0 : index
    %0 = vector.load %arg1[%c0, %c0_0] : memref<16x1024xbf16, #tpu.memory_space<vmem>>, vector<16x1024xbf16>
    %c0_1 = arith.constant 0 : index
    %c0_2 = arith.constant 0 : index
    %1 = vector.load %arg2[%c0_1, %c0_2] : memref<1024x128xbf16, #tpu.memory_space<vmem>>, vector<1024x128xbf16>
    %cst = arith.constant dense<0.000000e+00> : vector<16x128xf32>
    %2 = tpu.matmul %0, %1, %cst {dimension_numbers = #tpu.dot_dimension_numbers<[1], [0], [0], [1], [0, 0, 1, 1], [], []>} : vector<16x1024xbf16>, vector<1024x128xbf16>, vector<16x128xf32> -> vector<16x128xf32>
    %c0_3 = arith.constant 0 : index
    %c0_4 = arith.constant 0 : index
    %3 = vector.load %arg3[%c0_3, %c0_4] : memref<1x128xf32, #tpu.memory_space<vmem>>, vector<1x128xf32>
    %4 = vector.broadcast %3 : vector<1x128xf32> to vector<16x128xf32>
    %5 = arith.addf %2, %4 : vector<16x128xf32>
    %cst_5 = arith.constant 0.000000e+00 : f32
    %6 = vector.broadcast %cst_5 : f32 to vector<16x128xf32>
    %7 = arith.maximumf %5, %6 : vector<16x128xf32>
    %8 = arith.truncf %7 : vector<16x128xf32> to vector<16x128xbf16>
    %c0_6 = arith.constant 0 : index
    %c0_7 = arith.constant 0 : index
    %9 = vector.load %arg4[%c0_6, %c0_7] : memref<128x128xbf16, #tpu.memory_space<vmem>>, vector<128x128xbf16>
    %cst_8 = arith.constant dense<0.000000e+00> : vector<16x128xf32>
    %10 = tpu.matmul %8, %9, %cst_8 {dimension_numbers = #tpu.dot_dimension_numbers<[1], [0], [0], [1], [0, 0, 1, 1], [], []>} : vector<16x128xbf16>, vector<128x128xbf16>, vector<16x128xf32> -> vector<16x128xf32>
    %c0_9 = arith.constant 0 : index
    %c0_10 = arith.constant 0 : index
    %11 = vector.load %arg5[%c0_9, %c0_10] : memref<1x128xf32, #tpu.memory_space<vmem>>, vector<1x128xf32>
    %12 = vector.broadcast %11 : vector<1x128xf32> to vector<16x128xf32>
    %13 = arith.addf %10, %12 : vector<16x128xf32>
    %cst_11 = arith.constant 0.000000e+00 : f32
    %14 = vector.broadcast %cst_11 : f32 to vector<16x128xf32>
    %15 = arith.maximumf %13, %14 : vector<16x128xf32>
    %16 = arith.truncf %15 : vector<16x128xf32> to vector<16x128xbf16>
    %c0_12 = arith.constant 0 : index
    %c0_13 = arith.constant 0 : index
    %17 = vector.load %arg6[%c0_12, %c0_13] : memref<128x128xbf16, #tpu.memory_space<vmem>>, vector<128x128xbf16>
    %cst_14 = arith.constant dense<0.000000e+00> : vector<16x128xf32>
    %18 = tpu.matmul %16, %17, %cst_14 {dimension_numbers = #tpu.dot_dimension_numbers<[1], [0], [0], [1], [0, 0, 1, 1], [], []>} : vector<16x128xbf16>, vector<128x128xbf16>, vector<16x128xf32> -> vector<16x128xf32>
    %c0_15 = arith.constant 0 : index
    %c0_16 = arith.constant 0 : index
    %19 = vector.load %arg7[%c0_15, %c0_16] : memref<1x128xf32, #tpu.memory_space<vmem>>, vector<1x128xf32>
    %20 = vector.broadcast %19 : vector<1x128xf32> to vector<16x128xf32>
    %21 = arith.addf %18, %20 : vector<16x128xf32>
    %22 = arith.truncf %21 : vector<16x128xf32> to vector<16x128xbf16>
    %c0_17 = arith.constant 0 : index
    %c0_18 = arith.constant 0 : index
    %23 = vector.load %arg8[%c0_17, %c0_18] : memref<16x128xbf16, #tpu.memory_space<vmem>>, vector<16x128xbf16>
    tpu.vector_store %arg8[%c0_17, %c0_18], %22 {strides = array<i32>} : memref<16x128xbf16, #tpu.memory_space<vmem>>, vector<16x128xbf16>,
    return
  }
  func.func @transform_0(%arg0: i32) -> (i32, i32) {
    %c0_i32 = arith.constant 0 : i32
    %c0_i32_0 = arith.constant 0 : i32
    return %arg0, %c0_i32 : i32, i32
  }
  func.func @transform_1(%arg0: i32) -> (i32, i32) {
    %c0_i32 = arith.constant 0 : i32
    %c0_i32_0 = arith.constant 0 : i32
    %c0_i32_1 = arith.constant 0 : i32
    return %c0_i32, %c0_i32_0 : i32, i32
  }
  func.func @transform_2(%arg0: i32) -> (i32, i32) {
    %c0_i32 = arith.constant 0 : i32
    %c0_i32_0 = arith.constant 0 : i32
    %c0_i32_1 = arith.constant 0 : i32
    return %c0_i32, %c0_i32_0 : i32, i32
  }
  func.func @transform_3(%arg0: i32) -> (i32, i32) {
    %c0_i32 = arith.constant 0 : i32
    %c0_i32_0 = arith.constant 0 : i32
    %c0_i32_1 = arith.constant 0 : i32
    return %c0_i32, %c0_i32_0 : i32, i32
  }
  func.func @transform_4(%arg0: i32) -> (i32, i32) {
    %c0_i32 = arith.constant 0 : i32
    %c0_i32_0 = arith.constant 0 : i32
    %c0_i32_1 = arith.constant 0 : i32
    return %c0_i32, %c0_i32_0 : i32, i32
  }
  func.func @transform_5(%arg0: i32) -> (i32, i32) {
    %c0_i32 = arith.constant 0 : i32
    %c0_i32_0 = arith.constant 0 : i32
    %c0_i32_1 = arith.constant 0 : i32
    return %c0_i32, %c0_i32_0 : i32, i32
  }
  func.func @transform_6(%arg0: i32) -> (i32, i32) {
    %c0_i32 = arith.constant 0 : i32
    %c0_i32_0 = arith.constant 0 : i32
    %c0_i32_1 = arith.constant 0 : i32
    return %c0_i32, %c0_i32_0 : i32, i32
  }
  func.func @transform_7(%arg0: i32) -> (i32, i32) {
    %c0_i32 = arith.constant 0 : i32
    %c0_i32_0 = arith.constant 0 : i32
    return %arg0, %c0_i32 : i32, i32
  }
}

</mosaic_0001>

<llo_original>
// kernel: tpu_custom_call.1
$region0: #{tpu_custom_call.1}
  #allocation0 [shape = 'u32[]', space=smem, size = 0x4, offset = 0x4, fixed_abs, tag = 'smem constant byte address 0x4 - core index']
  #allocation1 [shape = 'u32[72,128]{1,0:T(1,128)}', space=vmem, size = 0x9000, scoped, tag = 'internal scratch']
  %s0 = inlined_call_operand.hbm [shape: bf16[16,1024], index: 0, kind: input, shape index: {}]
  %s1 = inlined_call_operand.hbm [shape: bf16[1024,128], index: 1, kind: input, shape index: {}]
  %s2 = inlined_call_operand.vmem [shape: f32[1,128], index: 2, kind: input, shape index: {}]
  %s3 = inlined_call_operand.hbm [shape: bf16[128,128], index: 3, kind: input, shape index: {}]
  %s4 = inlined_call_operand.vmem [shape: f32[1,128], index: 4, kind: input, shape index: {}]
  %s5 = inlined_call_operand.hbm [shape: bf16[128,128], index: 5, kind: input, shape index: {}]
  %s6 = inlined_call_operand.vmem [shape: f32[1,128], index: 6, kind: input, shape index: {}]
  %s7 = inlined_call_operand.hbm [shape: bf16[16,128], index: 7, kind: output, shape index: {}]
  %s8 = sld [smem:[#allocation0]]
  $region54: #{tpu_custom_call.1} parent=0
    _
  %s10 = ssub.s32 1, %s8
  %s11 = scalar_select 0, %s10, %s8
  $region1: #{tpu_custom_call.1} parent=0
    #allocation2 [shape = 'u8[32768]{0}', space=vmem, size = 0x8000, scoped, tag = 'input window, operand 0, single buffered']
    #allocation3 [shape = 's32[1]{0}', space=sflag, size = 0x4, scoped, tag = 'scoped memory for tpu_custom_call.1']
    #allocation4 [shape = 's32[1]{0}', space=sflag, size = 0x4, scoped, tag = 'scoped memory for tpu_custom_call.1']
    #allocation5 [shape = 'u8[262144]{0}', space=vmem, size = 0x40000, scoped, tag = 'input window, operand 1, single buffered']
    #allocation6 [shape = 's32[1]{0}', space=sflag, size = 0x4, scoped, tag = 'scoped memory for tpu_custom_call.1']
    #allocation7 [shape = 'u8[32768]{0}', space=vmem, size = 0x8000, scoped, tag = 'input window, operand 3, single buffered']
    #allocation8 [shape = 'u8[32768]{0}', space=vmem, size = 0x8000, scoped, tag = 'input window, operand 5, single buffered']
    #allocation9 [shape = 's32[1]{0}', space=sflag, size = 0x4, scoped, tag = 'scoped memory for tpu_custom_call.1']
    #allocation10 [shape = 'u8[4096]{0}', space=vmem, size = 0x1000, scoped, tag = 'output window, operand 0, single buffered']
    %12 = vsyncpa [#allocation3], 0
    %13 = vsyncpa [#allocation6], 0
    %14 = vsyncpa [#allocation9], 0
    %15 = vsyncpa [#allocation4], 0
    // Predicated region
    $region2: #{tpu_custom_call.1} parent=1 // pred_check
      _
    $region3: #{tpu_custom_call.1} parent=1 // pred_check_branch
      %17 = sbr.rel (0) target = $region5
    $region4: #{tpu_custom_call.1} parent=1 // pred_region
      %19 = vsyncadd [#allocation3], 0
      %s20 = sshll.u32 %s0, 4
      %s21 = int_to_ptr.hbm [resolvable:$true] %s20
      %s22 = sshll.u32 [#allocation2], 4
      %s23 = int_to_ptr.vmem [resolvable:$true] %s22
      %28 = dma.hbm_to_vmem [thread:$0]  %s21, 1024, %s23, [#allocation3], 512, 512, 32
    $region5: #{tpu_custom_call.1} parent=1 // pred_fallthru
      _
    // Predicated region
    $region6: #{tpu_custom_call.1} parent=1 // pred_check
      _
    $region7: #{tpu_custom_call.1} parent=1 // pred_check_branch
      %30 = sbr.rel (0) target = $region9
    $region8: #{tpu_custom_call.1} parent=1 // pred_region
      %32 = vsyncadd [#allocation6], 0
      %s33 = sshll.u32 %s1, 4
      %s34 = int_to_ptr.hbm [resolvable:$true] %s33
      %s35 = sshll.u32 [#allocation5], 4
      %s36 = int_to_ptr.vmem [resolvable:$true] %s35
      %41 = dma.hbm_to_vmem [thread:$0]  %s34, 8192, %s36, [#allocation6], 64, 64, 4
    $region9: #{tpu_custom_call.1} parent=1 // pred_fallthru
      _
    // Predicated region
    $region10: #{tpu_custom_call.1} parent=1 // pred_check
      _
    $region11: #{tpu_custom_call.1} parent=1 // pred_check_branch
      %43 = sbr.rel (0) target = $region13
    $region12: #{tpu_custom_call.1} parent=1 // pred_region
      _
    $region13: #{tpu_custom_call.1} parent=1 // pred_fallthru
      _
    // Predicated region
    $region14: #{tpu_custom_call.1} parent=1 // pred_check
      _
    $region15: #{tpu_custom_call.1} parent=1 // pred_check_branch
      %45 = sbr.rel (0) target = $region17
    $region16: #{tpu_custom_call.1} parent=1 // pred_region
      %47 = vsyncadd [#allocation6], 0
      %s48 = sshll.u32 %s3, 4
      %s49 = int_to_ptr.hbm [resolvable:$true] %s48
      %s50 = sshll.u32 [#allocation7], 4
      %s51 = int_to_ptr.vmem [resolvable:$true] %s50
      %56 = dma.hbm_to_vmem [thread:$0]  %s49, 1024, %s51, [#allocation6], 64, 64, 4
    $region17: #{tpu_custom_call.1} parent=1 // pred_fallthru
      _
    // Predicated region
    $region18: #{tpu_custom_call.1} parent=1 // pred_check
      _
    $region19: #{tpu_custom_call.1} parent=1 // pred_check_branch
      %58 = sbr.rel (0) target = $region21
    $region20: #{tpu_custom_call.1} parent=1 // pred_region
      _
    $region21: #{tpu_custom_call.1} parent=1 // pred_fallthru
      _
    // Predicated region
    $region22: #{tpu_custom_call.1} parent=1 // pred_check
      _
    $region23: #{tpu_custom_call.1} parent=1 // pred_check_branch
      %60 = sbr.rel (0) target = $region25
    $region24: #{tpu_custom_call.1} parent=1 // pred_region
      %62 = vsyncadd [#allocation9], 0
      %s63 = sshll.u32 %s5, 4
      %s64 = int_to_ptr.hbm [resolvable:$true] %s63
      %s65 = sshll.u32 [#allocation8], 4
      %s66 = int_to_ptr.vmem [resolvable:$true] %s65
      %71 = dma.hbm_to_vmem [thread:$0]  %s64, 1024, %s66, [#allocation9], 64, 64, 4
    $region25: #{tpu_custom_call.1} parent=1 // pred_fallthru
      _
    // Predicated region
    $region26: #{tpu_custom_call.1} parent=1 // pred_check
      _
    $region27: #{tpu_custom_call.1} parent=1 // pred_check_branch
      %73 = sbr.rel (0) target = $region29
    $region28: #{tpu_custom_call.1} parent=1 // pred_region
      _
    $region29: #{tpu_custom_call.1} parent=1 // pred_fallthru
      _
    // Predicated region
    $region30: #{tpu_custom_call.1} parent=1 // pred_check
      _
    $region31: #{tpu_custom_call.1} parent=1 // pred_check_branch
      %75 = sbr.rel (0) target = $region33
    $region32: #{tpu_custom_call.1} parent=1 // pred_region
      %77 = dma.done [#allocation3], 1024
    $region33: #{tpu_custom_call.1} parent=1 // pred_fallthru
      _
    // Predicated region
    $region34: #{tpu_custom_call.1} parent=1 // pred_check
      _
    $region35: #{tpu_custom_call.1} parent=1 // pred_check_branch
      %79 = sbr.rel (0) target = $region37
    $region36: #{tpu_custom_call.1} parent=1 // pred_region
      %81 = dma.done [#allocation6], 8192
    $region37: #{tpu_custom_call.1} parent=1 // pred_fallthru
      _
    // Predicated region
    $region38: #{tpu_custom_call.1} parent=1 // pred_check
      _
    $region39: #{tpu_custom_call.1} parent=1 // pred_check_branch
      %83 = sbr.rel (0) target = $region41
    $region40: #{tpu_custom_call.1} parent=1 // pred_region
      %85 = dma.done [#allocation6], 1024
    $region41: #{tpu_custom_call.1} parent=1 // pred_fallthru
      _
    // Predicated region
    $region42: #{tpu_custom_call.1} parent=1 // pred_check
      _
    $region43: #{tpu_custom_call.1} parent=1 // pred_check_branch
      %87 = sbr.rel (0) target = $region45
    $region44: #{tpu_custom_call.1} parent=1 // pred_region
      %89 = dma.done [#allocation9], 1024
    $region45: #{tpu_custom_call.1} parent=1 // pred_fallthru
      _
    %v90 = vld [vmem:[#allocation2] sm:$0xff]
    %v91 = vld [vmem:[#allocation2 + $0x8] sm:$0xff]
    %v92 = vld [vmem:[#allocation2 + $0x10] sm:$0xff]
    %v93 = vld [vmem:[#allocation2 + $0x18] sm:$0xff]
    %v94 = vld [vmem:[#allocation2 + $0x20] sm:$0xff]
    %v95 = vld [vmem:[#allocation2 + $0x28] sm:$0xff]
    %v96 = vld [vmem:[#allocation2 + $0x30] sm:$0xff]
    %v97 = vld [vmem:[#allocation2 + $0x38] sm:$0xff]
    %v98 = vld [vmem:[#allocation5] sm:$0xf]
    %v99 = vld [vmem:[#allocation5 + $0x4] sm:$0xf]
    %v100 = vld [vmem:[#allocation5 + $0x8] sm:$0xf]
    %v101 = vld [vmem:[#allocation5 + $0xc] sm:$0xf]
    %v102 = vld [vmem:[#allocation5 + $0x10] sm:$0xf]
    %v103 = vld [vmem:[#allocation5 + $0x14] sm:$0xf]
    %v104 = vld [vmem:[#allocation5 + $0x18] sm:$0xf]
    %v105 = vld [vmem:[#allocation5 + $0x1c] sm:$0xf]
    %v106 = vld [vmem:[#allocation5 + $0x20] sm:$0xf]
    %v107 = vld [vmem:[#allocation5 + $0x24] sm:$0xf]
    %v108 = vld [vmem:[#allocation5 + $0x28] sm:$0xf]
    %v109 = vld [vmem:[#allocation5 + $0x2c] sm:$0xf]
    %v110 = vld [vmem:[#allocation5 + $0x30] sm:$0xf]
    %v111 = vld [vmem:[#allocation5 + $0x34] sm:$0xf]
    %v112 = vld [vmem:[#allocation5 + $0x38] sm:$0xf]
    %v113 = vld [vmem:[#allocation5 + $0x3c] sm:$0xf]
    %v114 = vld [vmem:[#allocation5 + $0x40] sm:$0xf]
    %v115 = vld [vmem:[#allocation5 + $0x44] sm:$0xf]
    %v116 = vld [vmem:[#allocation5 + $0x48] sm:$0xf]
    %v117 = vld [vmem:[#allocation5 + $0x4c] sm:$0xf]
    %v118 = vld [vmem:[#allocation5 + $0x50] sm:$0xf]
    %v119 = vld [vmem:[#allocation5 + $0x54] sm:$0xf]
    %v120 = vld [vmem:[#allocation5 + $0x58] sm:$0xf]
    %v121 = vld [vmem:[#allocation5 + $0x5c] sm:$0xf]
    %v122 = vld [vmem:[#allocation5 + $0x60] sm:$0xf]
    %v123 = vld [vmem:[#allocation5 + $0x64] sm:$0xf]
    %v124 = vld [vmem:[#allocation5 + $0x68] sm:$0xf]
    %v125 = vld [vmem:[#allocation5 + $0x6c] sm:$0xf]
    %v126 = vld [vmem:[#allocation5 + $0x70] sm:$0xf]
    %v127 = vld [vmem:[#allocation5 + $0x74] sm:$0xf]
    %v128 = vld [vmem:[#allocation5 + $0x78] sm:$0xf]
    %v129 = vld [vmem:[#allocation5 + $0x7c] sm:$0xf]
    %v130 = vld [vmem:[#allocation5 + $0x80] sm:$0xf]
    %v131 = vld [vmem:[#allocation5 + $0x84] sm:$0xf]
    %v132 = vld [vmem:[#allocation5 + $0x88] sm:$0xf]
    %v133 = vld [vmem:[#allocation5 + $0x8c] sm:$0xf]
    %v134 = vld [vmem:[#allocation5 + $0x90] sm:$0xf]
    %v135 = vld [vmem:[#allocation5 + $0x94] sm:$0xf]
    %v136 = vld [vmem:[#allocation5 + $0x98] sm:$0xf]
    %v137 = vld [vmem:[#allocation5 + $0x9c] sm:$0xf]
    %v138 = vld [vmem:[#allocation5 + $0xa0] sm:$0xf]
    %v139 = vld [vmem:[#allocation5 + $0xa4] sm:$0xf]
    %v140 = vld [vmem:[#allocation5 + $0xa8] sm:$0xf]
    %v141 = vld [vmem:[#allocation5 + $0xac] sm:$0xf]
    %v142 = vld [vmem:[#allocation5 + $0xb0] sm:$0xf]
    %v143 = vld [vmem:[#allocation5 + $0xb4] sm:$0xf]
    %v144 = vld [vmem:[#allocation5 + $0xb8] sm:$0xf]
    %v145 = vld [vmem:[#allocation5 + $0xbc] sm:$0xf]
    %v146 = vld [vmem:[#allocation5 + $0xc0] sm:$0xf]
    %v147 = vld [vmem:[#allocation5 + $0xc4] sm:$0xf]
    %v148 = vld [vmem:[#allocation5 + $0xc8] sm:$0xf]
    %v149 = vld [vmem:[#allocation5 + $0xcc] sm:$0xf]
    %v150 = vld [vmem:[#allocation5 + $0xd0] sm:$0xf]
    %v151 = vld [vmem:[#allocation5 + $0xd4] sm:$0xf]
    %v152 = vld [vmem:[#allocation5 + $0xd8] sm:$0xf]
    %v153 = vld [vmem:[#allocation5 + $0xdc] sm:$0xf]
    %v154 = vld [vmem:[#allocation5 + $0xe0] sm:$0xf]
    %v155 = vld [vmem:[#allocation5 + $0xe4] sm:$0xf]
    %v156 = vld [vmem:[#allocation5 + $0xe8] sm:$0xf]
    %v157 = vld [vmem:[#allocation5 + $0xec] sm:$0xf]
    %v158 = vld [vmem:[#allocation5 + $0xf0] sm:$0xf]
    %v159 = vld [vmem:[#allocation5 + $0xf4] sm:$0xf]
    %v160 = vld [vmem:[#allocation5 + $0xf8] sm:$0xf]
    %v161 = vld [vmem:[#allocation5 + $0xfc] sm:$0xf]
    %v162 = vld [vmem:[#allocation5 + $0x100] sm:$0xf]
    %v163 = vld [vmem:[#allocation5 + $0x104] sm:$0xf]
    %v164 = vld [vmem:[#allocation5 + $0x108] sm:$0xf]
    %v165 = vld [vmem:[#allocation5 + $0x10c] sm:$0xf]
    %v166 = vld [vmem:[#allocation5 + $0x110] sm:$0xf]
    %v167 = vld [vmem:[#allocation5 + $0x114] sm:$0xf]
    %v168 = vld [vmem:[#allocation5 + $0x118] sm:$0xf]
    %v169 = vld [vmem:[#allocation5 + $0x11c] sm:$0xf]
    %v170 = vld [vmem:[#allocation5 + $0x120] sm:$0xf]
    %v171 = vld [vmem:[#allocation5 + $0x124] sm:$0xf]
    %v172 = vld [vmem:[#allocation5 + $0x128] sm:$0xf]
    %v173 = vld [vmem:[#allocation5 + $0x12c] sm:$0xf]
    %v174 = vld [vmem:[#allocation5 + $0x130] sm:$0xf]
    %v175 = vld [vmem:[#allocation5 + $0x134] sm:$0xf]
    %v176 = vld [vmem:[#allocation5 + $0x138] sm:$0xf]
    %v177 = vld [vmem:[#allocation5 + $0x13c] sm:$0xf]
    %v178 = vld [vmem:[#allocation5 + $0x140] sm:$0xf]
    %v179 = vld [vmem:[#allocation5 + $0x144] sm:$0xf]
    %v180 = vld [vmem:[#allocation5 + $0x148] sm:$0xf]
    %v181 = vld [vmem:[#allocation5 + $0x14c] sm:$0xf]
    %v182 = vld [vmem:[#allocation5 + $0x150] sm:$0xf]
    %v183 = vld [vmem:[#allocation5 + $0x154] sm:$0xf]
    %v184 = vld [vmem:[#allocation5 + $0x158] sm:$0xf]
    %v185 = vld [vmem:[#allocation5 + $0x15c] sm:$0xf]
    %v186 = vld [vmem:[#allocation5 + $0x160] sm:$0xf]
    %v187 = vld [vmem:[#allocation5 + $0x164] sm:$0xf]
    %v188 = vld [vmem:[#allocation5 + $0x168] sm:$0xf]
    %v189 = vld [vmem:[#allocation5 + $0x16c] sm:$0xf]
    %v190 = vld [vmem:[#allocation5 + $0x170] sm:$0xf]
    %v191 = vld [vmem:[#allocation5 + $0x174] sm:$0xf]
    %v192 = vld [vmem:[#allocation5 + $0x178] sm:$0xf]
    %v193 = vld [vmem:[#allocation5 + $0x17c] sm:$0xf]
    %v194 = vld [vmem:[#allocation5 + $0x180] sm:$0xf]
    %v195 = vld [vmem:[#allocation5 + $0x184] sm:$0xf]
    %v196 = vld [vmem:[#allocation5 + $0x188] sm:$0xf]
    %v197 = vld [vmem:[#allocation5 + $0x18c] sm:$0xf]
    %v198 = vld [vmem:[#allocation5 + $0x190] sm:$0xf]
    %v199 = vld [vmem:[#allocation5 + $0x194] sm:$0xf]
    %v200 = vld [vmem:[#allocation5 + $0x198] sm:$0xf]
    %v201 = vld [vmem:[#allocation5 + $0x19c] sm:$0xf]
    %v202 = vld [vmem:[#allocation5 + $0x1a0] sm:$0xf]
    %v203 = vld [vmem:[#allocation5 + $0x1a4] sm:$0xf]
    %v204 = vld [vmem:[#allocation5 + $0x1a8] sm:$0xf]
    %v205 = vld [vmem:[#allocation5 + $0x1ac] sm:$0xf]
    %v206 = vld [vmem:[#allocation5 + $0x1b0] sm:$0xf]
    %v207 = vld [vmem:[#allocation5 + $0x1b4] sm:$0xf]
    %v208 = vld [vmem:[#allocation5 + $0x1b8] sm:$0xf]
    %v209 = vld [vmem:[#allocation5 + $0x1bc] sm:$0xf]
    %v210 = vld [vmem:[#allocation5 + $0x1c0] sm:$0xf]
    %v211 = vld [vmem:[#allocation5 + $0x1c4] sm:$0xf]
    %v212 = vld [vmem:[#allocation5 + $0x1c8] sm:$0xf]
    %v213 = vld [vmem:[#allocation5 + $0x1cc] sm:$0xf]
    %v214 = vld [vmem:[#allocation5 + $0x1d0] sm:$0xf]
    %v215 = vld [vmem:[#allocation5 + $0x1d4] sm:$0xf]
    %v216 = vld [vmem:[#allocation5 + $0x1d8] sm:$0xf]
    %v217 = vld [vmem:[#allocation5 + $0x1dc] sm:$0xf]
    %v218 = vld [vmem:[#allocation5 + $0x1e0] sm:$0xf]
    %v219 = vld [vmem:[#allocation5 + $0x1e4] sm:$0xf]
    %v220 = vld [vmem:[#allocation5 + $0x1e8] sm:$0xf]
    %v221 = vld [vmem:[#allocation5 + $0x1ec] sm:$0xf]
    %v222 = vld [vmem:[#allocation5 + $0x1f0] sm:$0xf]
    %v223 = vld [vmem:[#allocation5 + $0x1f4] sm:$0xf]
    %v224 = vld [vmem:[#allocation5 + $0x1f8] sm:$0xf]
    %v225 = vld [vmem:[#allocation5 + $0x1fc] sm:$0xf]
    %v226 = vld [vmem:[%s2] sm:$0x1]
    %v228 = vperm.slane %v226, 0
    %v238 = vunpack.c.l.b16 %v90
    %v239 = vunpack.c.h.b16 %v90
    %v240 = vunpack.c.l.b16 %v91
    %v241 = vunpack.c.h.b16 %v91
    %v242 = vunpack.c.l.b16 %v92
    %v243 = vunpack.c.h.b16 %v92
    %v244 = vunpack.c.l.b16 %v93
    %v245 = vunpack.c.h.b16 %v93
    %v246 = vunpack.c.l.b16 %v94
    %v247 = vunpack.c.h.b16 %v94
    %v248 = vunpack.c.l.b16 %v95
    %v249 = vunpack.c.h.b16 %v95
    %v250 = vunpack.c.l.b16 %v96
    %v251 = vunpack.c.h.b16 %v96
    %v252 = vunpack.c.l.b16 %v97
    %v253 = vunpack.c.h.b16 %v97
    %v254 = vpack.c.b16 %v246, %v238
    %v255 = vpack.c.b16 %v247, %v239
    %v256 = vpack.c.b16 %v248, %v240
    %v257 = vpack.c.b16 %v249, %v241
    %v258 = vpack.c.b16 %v250, %v242
    %v259 = vpack.c.b16 %v251, %v243
    %v260 = vpack.c.b16 %v252, %v244
    %v261 = vpack.c.b16 %v253, %v245
    %v398 = vunpack.c.l.b16 %v98
    %v399 = vunpack.c.l.b16 %v99
    %v400 = vunpack.c.l.b16 %v100
    %v401 = vunpack.c.l.b16 %v101
    %v402 = vunpack.c.l.b16 %v102
    %v403 = vunpack.c.l.b16 %v103
    %v404 = vunpack.c.l.b16 %v104
    %v405 = vunpack.c.l.b16 %v105
    %v406 = vunpack.c.l.b16 %v106
    %v407 = vunpack.c.l.b16 %v107
    %v408 = vunpack.c.l.b16 %v108
    %v409 = vunpack.c.l.b16 %v109
    %v410 = vunpack.c.l.b16 %v110
    %v411 = vunpack.c.l.b16 %v111
    %v412 = vunpack.c.l.b16 %v112
    %v413 = vunpack.c.l.b16 %v113
    %v414 = vunpack.c.l.b16 %v114
    %v415 = vunpack.c.l.b16 %v115
    %v416 = vunpack.c.l.b16 %v116
    %v417 = vunpack.c.l.b16 %v117
    %v418 = vunpack.c.l.b16 %v118
    %v419 = vunpack.c.l.b16 %v119
    %v420 = vunpack.c.l.b16 %v120
    %v421 = vunpack.c.l.b16 %v121
    %v422 = vunpack.c.l.b16 %v122
    %v423 = vunpack.c.l.b16 %v123
    %v424 = vunpack.c.l.b16 %v124
    %v425 = vunpack.c.l.b16 %v125
    %v426 = vunpack.c.l.b16 %v126
    %v427 = vunpack.c.l.b16 %v127
    %v428 = vunpack.c.l.b16 %v128
    %v429 = vunpack.c.l.b16 %v129
    %v430 = vunpack.c.l.b16 %v130
    %v431 = vunpack.c.l.b16 %v131
    %v432 = vunpack.c.l.b16 %v132
    %v433 = vunpack.c.l.b16 %v133
    %v434 = vunpack.c.l.b16 %v134
    %v435 = vunpack.c.l.b16 %v135
    %v436 = vunpack.c.l.b16 %v136
    %v437 = vunpack.c.l.b16 %v137
    %v438 = vunpack.c.l.b16 %v138
    %v439 = vunpack.c.l.b16 %v139
    %v440 = vunpack.c.l.b16 %v140
    %v441 = vunpack.c.l.b16 %v141
    %v442 = vunpack.c.l.b16 %v142
    %v443 = vunpack.c.l.b16 %v143
    %v444 = vunpack.c.l.b16 %v144
    %v445 = vunpack.c.l.b16 %v145
    %v446 = vunpack.c.l.b16 %v146
    %v447 = vunpack.c.l.b16 %v147
    %v448 = vunpack.c.l.b16 %v148
    %v449 = vunpack.c.l.b16 %v149
    %v450 = vunpack.c.l.b16 %v150
    %v451 = vunpack.c.l.b16 %v151
    %v452 = vunpack.c.l.b16 %v152
    %v453 = vunpack.c.l.b16 %v153
    %v454 = vunpack.c.l.b16 %v154
    %v455 = vunpack.c.l.b16 %v155
    %v456 = vunpack.c.l.b16 %v156
    %v457 = vunpack.c.l.b16 %v157
    %v458 = vunpack.c.l.b16 %v158
    %v459 = vunpack.c.l.b16 %v159
    %v460 = vunpack.c.l.b16 %v160
    %v461 = vunpack.c.l.b16 %v161
    %v462 = vunpack.c.l.b16 %v162
    %v463 = vunpack.c.l.b16 %v163
    %v464 = vunpack.c.l.b16 %v164
    %v465 = vunpack.c.l.b16 %v165
    %v466 = vunpack.c.l.b16 %v166
    %v467 = vunpack.c.l.b16 %v167
    %v468 = vunpack.c.l.b16 %v168
    %v469 = vunpack.c.l.b16 %v169
    %v470 = vunpack.c.l.b16 %v170
    %v471 = vunpack.c.l.b16 %v171
    %v472 = vunpack.c.l.b16 %v172
    %v473 = vunpack.c.l.b16 %v173
    %v474 = vunpack.c.l.b16 %v174
    %v475 = vunpack.c.l.b16 %v175
    %v476 = vunpack.c.l.b16 %v176
    %v477 = vunpack.c.l.b16 %v177
    %v478 = vunpack.c.l.b16 %v178
    %v479 = vunpack.c.l.b16 %v179
    %v480 = vunpack.c.l.b16 %v180
    %v481 = vunpack.c.l.b16 %v181
    %v482 = vunpack.c.l.b16 %v182
    %v483 = vunpack.c.l.b16 %v183
    %v484 = vunpack.c.l.b16 %v184
    %v485 = vunpack.c.l.b16 %v185
    %v486 = vunpack.c.l.b16 %v186
    %v487 = vunpack.c.l.b16 %v187
    %v488 = vunpack.c.l.b16 %v188
    %v489 = vunpack.c.l.b16 %v189
    %v490 = vunpack.c.l.b16 %v190
    %v491 = vunpack.c.l.b16 %v191
    %v492 = vunpack.c.l.b16 %v192
    %v493 = vunpack.c.l.b16 %v193
    %v494 = vunpack.c.l.b16 %v194
    %v495 = vunpack.c.l.b16 %v195
    %v496 = vunpack.c.l.b16 %v196
    %v497 = vunpack.c.l.b16 %v197
    %v498 = vunpack.c.l.b16 %v198
    %v499 = vunpack.c.l.b16 %v199
    %v500 = vunpack.c.l.b16 %v200
    %v501 = vunpack.c.l.b16 %v201
    %v502 = vunpack.c.l.b16 %v202
    %v503 = vunpack.c.l.b16 %v203
    %v504 = vunpack.c.l.b16 %v204
    %v505 = vunpack.c.l.b16 %v205
    %v506 = vunpack.c.l.b16 %v206
    %v507 = vunpack.c.l.b16 %v207
    %v508 = vunpack.c.l.b16 %v208
    %v509 = vunpack.c.l.b16 %v209
    %v510 = vunpack.c.l.b16 %v210
    %v511 = vunpack.c.l.b16 %v211
    %v512 = vunpack.c.l.b16 %v212
    %v513 = vunpack.c.l.b16 %v213
    %v514 = vunpack.c.l.b16 %v214
    %v515 = vunpack.c.l.b16 %v215
    %v516 = vunpack.c.l.b16 %v216
    %v517 = vunpack.c.l.b16 %v217
    %v518 = vunpack.c.l.b16 %v218
    %v519 = vunpack.c.l.b16 %v219
    %v520 = vunpack.c.l.b16 %v220
    %v521 = vunpack.c.l.b16 %v221
    %v522 = vunpack.c.l.b16 %v222
    %v523 = vunpack.c.l.b16 %v223
    %v524 = vunpack.c.l.b16 %v224
    %v525 = vunpack.c.l.b16 %v225
    %v526 = vpack.c.b16 %v399, %v398
    %v527 = vpack.c.b16 %v401, %v400
    %v528 = vpack.c.b16 %v403, %v402
    %v529 = vpack.c.b16 %v405, %v404
    %v530 = vpack.c.b16 %v407, %v406
    %v531 = vpack.c.b16 %v409, %v408
    %v532 = vpack.c.b16 %v411, %v410
    %v533 = vpack.c.b16 %v413, %v412
    %v534 = vpack.c.b16 %v415, %v414
    %v535 = vpack.c.b16 %v417, %v416
    %v536 = vpack.c.b16 %v419, %v418
    %v537 = vpack.c.b16 %v421, %v420
    %v538 = vpack.c.b16 %v423, %v422
    %v539 = vpack.c.b16 %v425, %v424
    %v540 = vpack.c.b16 %v427, %v426
    %v541 = vpack.c.b16 %v429, %v428
    %v542 = vpack.c.b16 %v431, %v430
    %v543 = vpack.c.b16 %v433, %v432
    %v544 = vpack.c.b16 %v435, %v434
    %v545 = vpack.c.b16 %v437, %v436
    %v546 = vpack.c.b16 %v439, %v438
    %v547 = vpack.c.b16 %v441, %v440
    %v548 = vpack.c.b16 %v443, %v442
    %v549 = vpack.c.b16 %v445, %v444
    %v550 = vpack.c.b16 %v447, %v446
    %v551 = vpack.c.b16 %v449, %v448
    %v552 = vpack.c.b16 %v451, %v450
    %v553 = vpack.c.b16 %v453, %v452
    %v554 = vpack.c.b16 %v455, %v454
    %v555 = vpack.c.b16 %v457, %v456
    %v556 = vpack.c.b16 %v459, %v458
    %v557 = vpack.c.b16 %v461, %v460
    %v558 = vpack.c.b16 %v463, %v462
    %v559 = vpack.c.b16 %v465, %v464
    %v560 = vpack.c.b16 %v467, %v466
    %v561 = vpack.c.b16 %v469, %v468
    %v562 = vpack.c.b16 %v471, %v470
    %v563 = vpack.c.b16 %v473, %v472
    %v564 = vpack.c.b16 %v475, %v474
    %v565 = vpack.c.b16 %v477, %v476
    %v566 = vpack.c.b16 %v479, %v478
    %v567 = vpack.c.b16 %v481, %v480
    %v568 = vpack.c.b16 %v483, %v482
    %v569 = vpack.c.b16 %v485, %v484
    %v570 = vpack.c.b16 %v487, %v486
    %v571 = vpack.c.b16 %v489, %v488
    %v572 = vpack.c.b16 %v491, %v490
    %v573 = vpack.c.b16 %v493, %v492
    %v574 = vpack.c.b16 %v495, %v494
    %v575 = vpack.c.b16 %v497, %v496
    %v576 = vpack.c.b16 %v499, %v498
    %v577 = vpack.c.b16 %v501, %v500
    %v578 = vpack.c.b16 %v503, %v502
    %v579 = vpack.c.b16 %v505, %v504
    %v580 = vpack.c.b16 %v507, %v506
    %v581 = vpack.c.b16 %v509, %v508
    %v582 = vpack.c.b16 %v511, %v510
    %v583 = vpack.c.b16 %v513, %v512
    %v584 = vpack.c.b16 %v515, %v514
    %v585 = vpack.c.b16 %v517, %v516
    %v586 = vpack.c.b16 %v519, %v518
    %v587 = vpack.c.b16 %v521, %v520
    %v588 = vpack.c.b16 %v523, %v522
    %v589 = vpack.c.b16 %v525, %v524
    %654 = vmatpush.bf16.msra.mxu0 %v533
    %655 = vmatpush.bf16.msra.mxu0 %v532
    %656 = vmatpush.bf16.msra.mxu0 %v531
    %657 = vmatpush.bf16.msra.mxu0 %v530
    %658 = vmatpush.bf16.msra.mxu0 %v529
    %659 = vmatpush.bf16.msra.mxu0 %v528
    %660 = vmatpush.bf16.msra.mxu0 %v527
    %661 = vmatpush.bf16.msra.mxu0 %v526
    %662 = vmatmul.bf16.gmra.mxu0 %v254
    %v663 = vpop.f32.mrf.mxu0
    %v664 = vadd.f32 %v228, %v663
    %v665 = vpop.f32.mrf.mxu0
    %v666 = vadd.f32 %v228, %v665
    %667 = vdwg.mxu0
    %668 = vmatpush.bf16.msra.mxu0 %v541
    %669 = vmatpush.bf16.msra.mxu0 %v540
    %670 = vmatpush.bf16.msra.mxu0 %v539
    %671 = vmatpush.bf16.msra.mxu0 %v538
    %672 = vmatpush.bf16.msra.mxu0 %v537
    %673 = vmatpush.bf16.msra.mxu0 %v536
    %674 = vmatpush.bf16.msra.mxu0 %v535
    %675 = vmatpush.bf16.msra.mxu0 %v534
    %676 = vmatmul.bf16.gmra.mxu0 %v255
    %v677 = vpop.f32.mrf.mxu0
    %v678 = vadd.f32 %v664, %v677
    %v679 = vpop.f32.mrf.mxu0
    %v680 = vadd.f32 %v666, %v679
    %681 = vdwg.mxu0
    %682 = vmatpush.bf16.msra.mxu0 %v549
    %683 = vmatpush.bf16.msra.mxu0 %v548
    %684 = vmatpush.bf16.msra.mxu0 %v547
    %685 = vmatpush.bf16.msra.mxu0 %v546
    %686 = vmatpush.bf16.msra.mxu0 %v545
    %687 = vmatpush.bf16.msra.mxu0 %v544
    %688 = vmatpush.bf16.msra.mxu0 %v543
    %689 = vmatpush.bf16.msra.mxu0 %v542
    %690 = vmatmul.bf16.gmra.mxu0 %v256
    %v691 = vpop.f32.mrf.mxu0
    %v692 = vadd.f32 %v678, %v691
    %v693 = vpop.f32.mrf.mxu0
    %v694 = vadd.f32 %v680, %v693
    %695 = vdwg.mxu0
    %696 = vmatpush.bf16.msra.mxu0 %v557
    %697 = vmatpush.bf16.msra.mxu0 %v556
    %698 = vmatpush.bf16.msra.mxu0 %v555
    %699 = vmatpush.bf16.msra.mxu0 %v554
    %700 = vmatpush.bf16.msra.mxu0 %v553
    %701 = vmatpush.bf16.msra.mxu0 %v552
    %702 = vmatpush.bf16.msra.mxu0 %v551
    %703 = vmatpush.bf16.msra.mxu0 %v550
    %704 = vmatmul.bf16.gmra.mxu0 %v257
    %v705 = vpop.f32.mrf.mxu0
    %v706 = vadd.f32 %v692, %v705
    %v707 = vpop.f32.mrf.mxu0
    %v708 = vadd.f32 %v694, %v707
    %709 = vdwg.mxu0
    %710 = vmatpush.bf16.msra.mxu0 %v565
    %711 = vmatpush.bf16.msra.mxu0 %v564
    %712 = vmatpush.bf16.msra.mxu0 %v563
    %713 = vmatpush.bf16.msra.mxu0 %v562
    %714 = vmatpush.bf16.msra.mxu0 %v561
    %715 = vmatpush.bf16.msra.mxu0 %v560
    %716 = vmatpush.bf16.msra.mxu0 %v559
    %717 = vmatpush.bf16.msra.mxu0 %v558
    %718 = vmatmul.bf16.gmra.mxu0 %v258
    %v719 = vpop.f32.mrf.mxu0
    %v720 = vadd.f32 %v706, %v719
    %v721 = vpop.f32.mrf.mxu0
    %v722 = vadd.f32 %v708, %v721
    %723 = vdwg.mxu0
    %724 = vmatpush.bf16.msra.mxu0 %v573
    %725 = vmatpush.bf16.msra.mxu0 %v572
    %726 = vmatpush.bf16.msra.mxu0 %v571
    %727 = vmatpush.bf16.msra.mxu0 %v570
    %728 = vmatpush.bf16.msra.mxu0 %v569
    %729 = vmatpush.bf16.msra.mxu0 %v568
    %730 = vmatpush.bf16.msra.mxu0 %v567
    %731 = vmatpush.bf16.msra.mxu0 %v566
    %732 = vmatmul.bf16.gmra.mxu0 %v259
    %v733 = vpop.f32.mrf.mxu0
    %v734 = vadd.f32 %v720, %v733
    %v735 = vpop.f32.mrf.mxu0
    %v736 = vadd.f32 %v722, %v735
    %737 = vdwg.mxu0
    %738 = vmatpush.bf16.msra.mxu0 %v581
    %739 = vmatpush.bf16.msra.mxu0 %v580
    %740 = vmatpush.bf16.msra.mxu0 %v579
    %741 = vmatpush.bf16.msra.mxu0 %v578
    %742 = vmatpush.bf16.msra.mxu0 %v577
    %743 = vmatpush.bf16.msra.mxu0 %v576
    %744 = vmatpush.bf16.msra.mxu0 %v575
    %745 = vmatpush.bf16.msra.mxu0 %v574
    %746 = vmatmul.bf16.gmra.mxu0 %v260
    %v747 = vpop.f32.mrf.mxu0
    %v748 = vadd.f32 %v734, %v747
    %v749 = vpop.f32.mrf.mxu0
    %v750 = vadd.f32 %v736, %v749
    %751 = vdwg.mxu0
    %752 = vmatpush.bf16.msra.mxu0 %v589
    %753 = vmatpush.bf16.msra.mxu0 %v588
    %754 = vmatpush.bf16.msra.mxu0 %v587
    %755 = vmatpush.bf16.msra.mxu0 %v586
    %756 = vmatpush.bf16.msra.mxu0 %v585
    %757 = vmatpush.bf16.msra.mxu0 %v584
    %758 = vmatpush.bf16.msra.mxu0 %v583
    %759 = vmatpush.bf16.msra.mxu0 %v582
    %760 = vmatmul.bf16.gmra.mxu0 %v261
    %v761 = vpop.f32.mrf.mxu0
    %v762 = vadd.f32 %v748, %v761
    %v763 = vpop.f32.mrf.mxu0
    %v764 = vadd.f32 %v750, %v763
    %765 = vdwg.mxu0
    %v766 = vmax.f32 %v762, 0.0
    %v767 = vmax.f32 %v764, 0.0
    %v768 = vpack.c.bf16 %v767, %v766
    %v769 = vld [vmem:[#allocation7] sm:$0xf]
    %v770 = vld [vmem:[#allocation7 + $0x4] sm:$0xf]
    %v771 = vld [vmem:[#allocation7 + $0x8] sm:$0xf]
    %v772 = vld [vmem:[#allocation7 + $0xc] sm:$0xf]
    %v773 = vld [vmem:[#allocation7 + $0x10] sm:$0xf]
    %v774 = vld [vmem:[#allocation7 + $0x14] sm:$0xf]
    %v775 = vld [vmem:[#allocation7 + $0x18] sm:$0xf]
    %v776 = vld [vmem:[#allocation7 + $0x1c] sm:$0xf]
    %v777 = vld [vmem:[#allocation7 + $0x20] sm:$0xf]
    %v778 = vld [vmem:[#allocation7 + $0x24] sm:$0xf]
    %v779 = vld [vmem:[#allocation7 + $0x28] sm:$0xf]
    %v780 = vld [vmem:[#allocation7 + $0x2c] sm:$0xf]
    %v781 = vld [vmem:[#allocation7 + $0x30] sm:$0xf]
    %v782 = vld [vmem:[#allocation7 + $0x34] sm:$0xf]
    %v783 = vld [vmem:[#allocation7 + $0x38] sm:$0xf]
    %v784 = vld [vmem:[#allocation7 + $0x3c] sm:$0xf]
    %v785 = vld [vmem:[%s4] sm:$0x1]
    %v787 = vperm.slane %v785, 0
    %v805 = vunpack.c.l.b16 %v769
    %v806 = vunpack.c.l.b16 %v770
    %v807 = vunpack.c.l.b16 %v771
    %v808 = vunpack.c.l.b16 %v772
    %v809 = vunpack.c.l.b16 %v773
    %v810 = vunpack.c.l.b16 %v774
    %v811 = vunpack.c.l.b16 %v775
    %v812 = vunpack.c.l.b16 %v776
    %v813 = vunpack.c.l.b16 %v777
    %v814 = vunpack.c.l.b16 %v778
    %v815 = vunpack.c.l.b16 %v779
    %v816 = vunpack.c.l.b16 %v780
    %v817 = vunpack.c.l.b16 %v781
    %v818 = vunpack.c.l.b16 %v782
    %v819 = vunpack.c.l.b16 %v783
    %v820 = vunpack.c.l.b16 %v784
    %v821 = vpack.c.b16 %v806, %v805
    %v822 = vpack.c.b16 %v808, %v807
    %v823 = vpack.c.b16 %v810, %v809
    %v824 = vpack.c.b16 %v812, %v811
    %v825 = vpack.c.b16 %v814, %v813
    %v826 = vpack.c.b16 %v816, %v815
    %v827 = vpack.c.b16 %v818, %v817
    %v828 = vpack.c.b16 %v820, %v819
    %837 = vmatpush.bf16.msra.mxu0 %v828
    %838 = vmatpush.bf16.msra.mxu0 %v827
    %839 = vmatpush.bf16.msra.mxu0 %v826
    %840 = vmatpush.bf16.msra.mxu0 %v825
    %841 = vmatpush.bf16.msra.mxu0 %v824
    %842 = vmatpush.bf16.msra.mxu0 %v823
    %843 = vmatpush.bf16.msra.mxu0 %v822
    %844 = vmatpush.bf16.msra.mxu0 %v821
    %845 = vmatmul.bf16.gmra.mxu0 %v768
    %v846 = vpop.f32.mrf.mxu0
    %v847 = vadd.f32 %v787, %v846
    %v848 = vpop.f32.mrf.mxu0
    %v849 = vadd.f32 %v787, %v848
    %850 = vdwg.mxu0
    %v851 = vmax.f32 %v847, 0.0
    %v852 = vmax.f32 %v849, 0.0
    %v853 = vpack.c.bf16 %v852, %v851
    %v854 = vld [vmem:[#allocation8] sm:$0xf]
    %v855 = vld [vmem:[#allocation8 + $0x4] sm:$0xf]
    %v856 = vld [vmem:[#allocation8 + $0x8] sm:$0xf]
    %v857 = vld [vmem:[#allocation8 + $0xc] sm:$0xf]
    %v858 = vld [vmem:[#allocation8 + $0x10] sm:$0xf]
    %v859 = vld [vmem:[#allocation8 + $0x14] sm:$0xf]
    %v860 = vld [vmem:[#allocation8 + $0x18] sm:$0xf]
    %v861 = vld [vmem:[#allocation8 + $0x1c] sm:$0xf]
    %v862 = vld [vmem:[#allocation8 + $0x20] sm:$0xf]
    %v863 = vld [vmem:[#allocation8 + $0x24] sm:$0xf]
    %v864 = vld [vmem:[#allocation8 + $0x28] sm:$0xf]
    %v865 = vld [vmem:[#allocation8 + $0x2c] sm:$0xf]
    %v866 = vld [vmem:[#allocation8 + $0x30] sm:$0xf]
    %v867 = vld [vmem:[#allocation8 + $0x34] sm:$0xf]
    %v868 = vld [vmem:[#allocation8 + $0x38] sm:$0xf]
    %v869 = vld [vmem:[#allocation8 + $0x3c] sm:$0xf]
    %v870 = vld [vmem:[%s6] sm:$0x1]
    %v872 = vperm.slane %v870, 0
    %v890 = vunpack.c.l.b16 %v854
    %v891 = vunpack.c.l.b16 %v855
    %v892 = vunpack.c.l.b16 %v856
    %v893 = vunpack.c.l.b16 %v857
    %v894 = vunpack.c.l.b16 %v858
    %v895 = vunpack.c.l.b16 %v859
    %v896 = vunpack.c.l.b16 %v860
    %v897 = vunpack.c.l.b16 %v861
    %v898 = vunpack.c.l.b16 %v862
    %v899 = vunpack.c.l.b16 %v863
    %v900 = vunpack.c.l.b16 %v864
    %v901 = vunpack.c.l.b16 %v865
    %v902 = vunpack.c.l.b16 %v866
    %v903 = vunpack.c.l.b16 %v867
    %v904 = vunpack.c.l.b16 %v868
    %v905 = vunpack.c.l.b16 %v869
    %v906 = vpack.c.b16 %v891, %v890
    %v907 = vpack.c.b16 %v893, %v892
    %v908 = vpack.c.b16 %v895, %v894
    %v909 = vpack.c.b16 %v897, %v896
    %v910 = vpack.c.b16 %v899, %v898
    %v911 = vpack.c.b16 %v901, %v900
    %v912 = vpack.c.b16 %v903, %v902
    %v913 = vpack.c.b16 %v905, %v904
    %922 = vmatpush.bf16.msra.mxu0 %v913
    %923 = vmatpush.bf16.msra.mxu0 %v912
    %924 = vmatpush.bf16.msra.mxu0 %v911
    %925 = vmatpush.bf16.msra.mxu0 %v910
    %926 = vmatpush.bf16.msra.mxu0 %v909
    %927 = vmatpush.bf16.msra.mxu0 %v908
    %928 = vmatpush.bf16.msra.mxu0 %v907
    %929 = vmatpush.bf16.msra.mxu0 %v906
    %930 = vmatmul.bf16.gmra.mxu0 %v853
    %v931 = vpop.f32.mrf.mxu0
    %v932 = vadd.f32 %v872, %v931
    %v933 = vpop.f32.mrf.mxu0
    %v934 = vadd.f32 %v872, %v933
    %935 = vdwg.mxu0
    %v936 = vpack.c.bf16 %v932, %v932
    %v937 = vpack.c.bf16 %v934, %v934
    %938 = vst [vmem:[#allocation10] sm:$0xf] %v936
    %939 = vst [vmem:[#allocation10 + $0x4] sm:$0xf] %v937
    // Predicated region
    $region46: #{tpu_custom_call.1} parent=1 // pred_check
      _
    $region47: #{tpu_custom_call.1} parent=1 // pred_check_branch
      %941 = sbr.rel (0) target = $region49
    $region48: #{tpu_custom_call.1} parent=1 // pred_region
      %943 = vsyncadd [#allocation4], 0
      %s944 = sshll.u32 [#allocation10], 4
      %s945 = int_to_ptr.vmem [resolvable:$true] %s944
      %s946 = sshll.u32 %s7, 4
      %s947 = int_to_ptr.hbm [resolvable:$true] %s946
      %952 = dma.vmem_to_hbm [thread:$0]  %s945, 128, %s947, [#allocation4], 64, 64, 4
    $region49: #{tpu_custom_call.1} parent=1 // pred_fallthru
      _
    // Predicated region
    $region50: #{tpu_custom_call.1} parent=1 // pred_check
      _
    $region51: #{tpu_custom_call.1} parent=1 // pred_check_branch
      %954 = sbr.rel (0) target = $region53
    $region52: #{tpu_custom_call.1} parent=1 // pred_region
      %956 = dma.done [#allocation4], 128
    $region53: #{tpu_custom_call.1} parent=1 // pred_fallthru
      _
    %957 = vsyncpa [#allocation3], 1
    %958 = vsyncpa [#allocation6], 1
    %959 = vsyncpa [#allocation9], 1
    %960 = vsyncpa [#allocation4], 1

</llo_original>
